<compile_context>
chip_gen: v5e
topology: v5e:2x2
jax: 0.10.0
libtpu: 0.0.40
codegen_flags: <defaults>
</compile_context>

<pallas_src>
import jax
import jax.numpy as jnp
from jax.experimental import pallas as pl
from jax.experimental.pallas import tpu as pltpu


def _mean_pool_kernel(h_ref, m_ref, o_ref, msum_ref):
    """One grid step.

    h_ref:    (Bb, tS, tH)  hidden states, native dtype (f32 / bf16 / fp16)
    m_ref:    (Bb, 1,  tS)  attention mask, native dtype, lane-dense over S
    o_ref:    (Bb, 1,  tH)  f32 output block; doubles as the S-axis accumulator
    msum_ref: (Bb, 1)       f32 scratch accumulating the per-row token counts
    """
    s = pl.program_id(2)

    @pl.when(s == 0)
    def _():
        o_ref[...] = jnp.zeros_like(o_ref)
        msum_ref[...] = jnp.zeros_like(msum_ref)

    h = h_ref[...]                              # (Bb, tS, tH)
    m = m_ref[...].astype(jnp.float32)          # (Bb, 1, tS)

    if h.dtype == jnp.float32:
        # 2-pass hi/lo bf16 split: ~3x cheaper than Precision.HIGHEST's f32
        # emulation, exact to ~2^-16 relative (0/1 mask is exact in bf16).
        m_c = m.astype(jnp.bfloat16)
        h_hi = h.astype(jnp.bfloat16)
        h_lo = (h - h_hi.astype(jnp.float32)).astype(jnp.bfloat16)
        part = (
            jnp.einsum("bqs,bsh->bqh", m_c, h_hi, preferred_element_type=jnp.float32)
            + jnp.einsum("bqs,bsh->bqh", m_c, h_lo, preferred_element_type=jnp.float32)
        )
    else:
        # 0/1 mask is exact in bf16/fp16.
        # TODO(synk): a soft (fractional) float mask loses precision here when
        # the hidden states are sub-f32; guard upstream if that case matters.
        part = jnp.einsum(
            "bqs,bsh->bqh", m.astype(h.dtype), h, preferred_element_type=jnp.float32
        )

    o_ref[...] += part                          # (Bb, 1, tH), f32 accumulate
    msum_ref[...] += jnp.sum(m, axis=-1)        # (Bb, 1), XLU (free slot)

    @pl.when(s == pl.num_programs(2) - 1)
    def _():
        denom = jnp.maximum(msum_ref[...], 1e-9)        # torch.clamp(min=1e-9)
        o_ref[...] = o_ref[...] / denom[:, :, None]


def _divisors(n, step=1):
    """Divisors of n that are multiples of `step`, ascending; always ends with n."""
    out = [d for d in range(step, n, step) if n % d == 0]
    out.append(n)
    return out


def _vmem_capacity_bytes():
    try:
        return int(pltpu.get_tpu_info().vmem_capacity_bytes)
    except Exception:
        return 64 << 20  # conservative default: v7x physical VMEM per TensorCore


def _choose_blocks(B, S, H, itemsize, budget):
    """Pick (Bb, tS, tH) with the hidden-state block hard-bounded by `budget`.

    Mosaic constraints: the h block's trailing dims (tS, tH) must be multiples
    of (8, 128) or equal the full extents; the lane-dense mask block (Bb,1,tS)
    additionally needs tS % 128 == 0 or tS == S.  Bb only ever sits on leading
    dims (output is (B,1,H)), so any divisor of B is legal (down to 1).
    Priority: lane-dense tH first, then keep S untiled, then pack batch rows.
    """
    h_cands = _divisors(H, 128)   # ascending, ends with H
    s_cands = _divisors(S, 128)   # ascending, ends with S
    b_cands = _divisors(B, 1)     # ascending, ends with B

    def fits(bb, ts, th):
        return bb * ts * th * itemsize <= budget

    tH = h_cands[0]
    for th in h_cands:
        if fits(1, s_cands[0], th):
            tH = th
    tS = s_cands[0]
    for ts in s_cands:
        if fits(1, ts, tH):
            tS = ts
    Bb = 1
    for bb in b_cands:
        if fits(bb, tS, tH):
            Bb = bb

    # Guarantee >=2 steps on a *parallel* axis when possible (the S axis is
    # "arbitrary" and never sharded), so v7x's two TensorCores both get work.
    if (B // Bb) * (H // tH) < 2:
        if B >= 2:
            Bb = max(d for d in b_cands if d <= B // 2)
        elif len(h_cands) >= 2:
            tH = h_cands[-2]
    return Bb, tS, tH


def mean_pooling(last_hidden_state, attention_mask, *, block_budget_bytes=None):
    """Pallas equivalent of MeanPooling.forward.

    last_hidden_state: (B, S, H) float (f32 / bf16 / fp16), streamed as-is
    attention_mask:    (B, S)    int / bool / float (0/1 values expected)
    returns:           (B, H)    float32 (matches PyTorch promotion via mask.float())
    """
    B, S, H = last_hidden_state.shape
    assert attention_mask.shape == (B, S)

    if attention_mask.dtype == jnp.bool_:
        attention_mask = attention_mask.astype(jnp.int32)
    mask = attention_mask.reshape(B, 1, S)       # lane-dense over S, native dtype

    itemsize = last_hidden_state.dtype.itemsize
    vmem_cap = _vmem_capacity_bytes()
    if block_budget_bytes is None:
        # Generation-aware per-buffer budget: ~10.7 MiB on v7x (64 MiB VMEM),
        # 16 MiB on v5e/v6e (128 MiB) -> per-step DMA time dwarfs the ~0.35 us
        # pipeline overhead on every generation.
        block_budget_bytes = min(16 << 20, max(2 << 20, vmem_cap // 6))
    vmem_limit = int(min(vmem_cap * 3 // 4, 64 << 20))   # 48 MiB v7x, 64 MiB v5e/v6e

    Bb, tS, tH = _choose_blocks(B, S, H, itemsize, block_budget_bytes)
    grid = (B // Bb, H // tH, S // tS)

    flops = 2 * B * S * H * (2 if last_hidden_state.dtype == jnp.float32 else 1)
    bytes_accessed = (
        B * S * H * itemsize + B * S * mask.dtype.itemsize + B * H * 4
    )

    out = pl.pallas_call(
        _mean_pool_kernel,
        out_shape=jax.ShapeDtypeStruct((B, 1, H), jnp.float32),
        grid=grid,
        in_specs=[
            pl.BlockSpec((Bb, tS, tH), lambda i, j, s: (i, s, j)),
            pl.BlockSpec((Bb, 1, tS), lambda i, j, s: (i, 0, s)),  # reused across H tiles
        ],
        out_specs=pl.BlockSpec((Bb, 1, tH), lambda i, j, s: (i, 0, j)),
        scratch_shapes=[pltpu.VMEM((Bb, 1), jnp.float32)],
        compiler_params=pltpu.CompilerParams(
            dimension_semantics=("parallel", "parallel", "arbitrary"),
            vmem_limit_bytes=vmem_limit,
        ),
        cost_estimate=pl.CostEstimate(
            flops=flops, transcendentals=0, bytes_accessed=bytes_accessed
        ),
    )(last_hidden_state, mask)
    return out.reshape(B, H)


def _reference(last_hidden_state, attention_mask):
    m = attention_mask.astype(jnp.float32)[..., None]
    sum_emb = jnp.sum(last_hidden_state.astype(jnp.float32) * m, axis=1)
    sum_mask = jnp.maximum(jnp.sum(m, axis=1), 1e-9)
    return sum_emb / sum_mask


if __name__ == "__main__":
    key = jax.random.PRNGKey(0)
    k1, k2 = jax.random.split(key)

    # Small shapes implied by the module: batch=2, seq=8, hidden=32.
    B, S, H = 2, 8, 32
    lhs = jax.random.normal(k1, (B, S, H), dtype=jnp.float32)
    lengths = jnp.array([5, 3], dtype=jnp.int32)          # deterministic mask
    attention_mask = (jnp.arange(S)[None, :] < lengths[:, None]).astype(jnp.int32)

    # float32 path (hi/lo MXU split)
    out = jax.block_until_ready(mean_pooling(lhs, attention_mask))
    ref = _reference(lhs, attention_mask)
    assert out.shape == (B, H) and out.dtype == jnp.float32
    assert jnp.allclose(out, ref, atol=1e-4, rtol=1e-4), "f32 mismatch vs reference"

    # bf16 streaming path (native dtype on HBM, f32 MXU accumulation)
    lhs_bf16 = lhs.astype(jnp.bfloat16)
    out_bf16 = jax.block_until_ready(mean_pooling(lhs_bf16, attention_mask))
    ref_bf16 = _reference(lhs_bf16, attention_mask)
    assert jnp.allclose(out_bf16, ref_bf16, atol=2e-2, rtol=2e-2), "bf16 mismatch"

    # Exercise the S-reduction / accumulator path with a tiny block budget.
    B2, S2, H2 = 2, 256, 128
    lhs2 = jax.random.normal(k2, (B2, S2, H2), dtype=jnp.float32)
    lengths2 = jnp.array([200, 37], dtype=jnp.int32)       # crosses the S-tile boundary
    mask2 = (jnp.arange(S2)[None, :] < lengths2[:, None]).astype(jnp.int32)
    out2 = jax.block_until_ready(
        mean_pooling(lhs2, mask2, block_budget_bytes=96 * 1024)
    )
    ref2 = _reference(lhs2, mask2)
    assert jnp.allclose(out2, ref2, atol=1e-4, rtol=1e-4), "S-tiled path mismatch"

    print("KERNEL_OK")
</pallas_src>

<mosaic_0001>
module attributes {stable_mosaic.version = 11 : i64} {
  func.func @_mean_pool_kernel(%arg0: i32, %arg1: i32, %arg2: i32, %arg3: memref<1x8x32xf32, #tpu.memory_space<vmem>>, %arg4: memref<1x1x8xi32, #tpu.memory_space<vmem>>, %arg5: memref<1x1x32xf32, #tpu.memory_space<vmem>>, %arg6: memref<1x1xf32, #tpu.memory_space<vmem>>) attributes {dimension_semantics = [#tpu.dimension_semantics<parallel>, #tpu.dimension_semantics<parallel>, #tpu.dimension_semantics<arbitrary>], iteration_bounds = array<i64: 2, 1, 1>, scalar_prefetch = 0 : i64, scratch_operands = 1 : i64, tpu.core_type = #tpu.core_type<tc>, window_params = [{transform_indices = @transform_0, window_bounds = array<i64: 1, 8, 32>}, {transform_indices = @transform_1, window_bounds = array<i64: 1, 1, 8>}, {transform_indices = @transform_2, window_bounds = array<i64: 1, 1, 32>}]} {
    %c0_i32 = arith.constant 0 : i32
    %0 = arith.cmpi eq, %arg2, %c0_i32 : i32
    %1 = arith.extui %0 : i1 to i32
    %c0_i32_0 = arith.constant 0 : i32
    %2 = arith.cmpi ne, %1, %c0_i32_0 : i32
    scf.if %2 {
      %cst_20 = arith.constant 0.000000e+00 : f32
      %24 = vector.broadcast %cst_20 : f32 to vector<1x1x32xf32>
      %c0_21 = arith.constant 0 : index
      %c0_22 = arith.constant 0 : index
      %c0_23 = arith.constant 0 : index
      %25 = vector.load %arg5[%c0_21, %c0_22, %c0_23] : memref<1x1x32xf32, #tpu.memory_space<vmem>>, vector<1x1x32xf32>
      tpu.vector_store %arg5[%c0_21, %c0_22, %c0_23], %24 {strides = array<i32>} : memref<1x1x32xf32, #tpu.memory_space<vmem>>, vector<1x1x32xf32>,
      %cst_24 = arith.constant 0.000000e+00 : f32
      %26 = vector.broadcast %cst_24 : f32 to vector<1x1xf32>
      %c0_25 = arith.constant 0 : index
      %c0_26 = arith.constant 0 : index
      %27 = vector.load %arg6[%c0_25, %c0_26] : memref<1x1xf32, #tpu.memory_space<vmem>>, vector<1x1xf32>
      tpu.vector_store %arg6[%c0_25, %c0_26], %26 {strides = array<i32>} : memref<1x1xf32, #tpu.memory_space<vmem>>, vector<1x1xf32>,
    } else {
    }
    %c0 = arith.constant 0 : index
    %c0_1 = arith.constant 0 : index
    %c0_2 = arith.constant 0 : index
    %3 = vector.load %arg3[%c0, %c0_1, %c0_2] : memref<1x8x32xf32, #tpu.memory_space<vmem>>, vector<1x8x32xf32>
    %c0_3 = arith.constant 0 : index
    %c0_4 = arith.constant 0 : index
    %c0_5 = arith.constant 0 : index
    %4 = vector.load %arg4[%c0_3, %c0_4, %c0_5] : memref<1x1x8xi32, #tpu.memory_space<vmem>>, vector<1x1x8xi32>
    %5 = arith.sitofp %4 : vector<1x1x8xi32> to vector<1x1x8xf32>
    %6 = arith.truncf %5 : vector<1x1x8xf32> to vector<1x1x8xbf16>
    %7 = arith.truncf %3 : vector<1x8x32xf32> to vector<1x8x32xbf16>
    %8 = arith.extf %7 : vector<1x8x32xbf16> to vector<1x8x32xf32>
    %9 = arith.subf %3, %8 : vector<1x8x32xf32>
    %10 = arith.truncf %9 : vector<1x8x32xf32> to vector<1x8x32xbf16>
    "tpu.trace_start"() <{level = 10 : i32, message = "bqs,bsh->bqh"}> : () -> ()
    %cst = arith.constant dense<0.000000e+00> : vector<1x1x32xf32>
    %11 = tpu.matmul %6, %7, %cst {dimension_numbers = #tpu.dot_dimension_numbers<[2], [1], [1], [2], [0, 0, 0, 1, 1, 2], [0], [0]>} : vector<1x1x8xbf16>, vector<1x8x32xbf16>, vector<1x1x32xf32> -> vector<1x1x32xf32>
    %cst_6 = arith.constant dense<0.000000e+00> : vector<1x1x32xf32>
    %12 = tpu.matmul %6, %10, %cst_6 {dimension_numbers = #tpu.dot_dimension_numbers<[2], [1], [1], [2], [0, 0, 0, 1, 1, 2], [0], [0]>} : vector<1x1x8xbf16>, vector<1x8x32xbf16>, vector<1x1x32xf32> -> vector<1x1x32xf32>
    "tpu.trace_stop"() : () -> ()
    %13 = arith.addf %11, %12 : vector<1x1x32xf32>
    %c0_7 = arith.constant 0 : index
    %c0_8 = arith.constant 0 : index
    %c0_9 = arith.constant 0 : index
    %14 = vector.load %arg5[%c0_7, %c0_8, %c0_9] : memref<1x1x32xf32, #tpu.memory_space<vmem>>, vector<1x1x32xf32>
    %15 = arith.addf %14, %13 : vector<1x1x32xf32>
    %c0_10 = arith.constant 0 : index
    %c0_11 = arith.constant 0 : index
    %c0_12 = arith.constant 0 : index
    %16 = vector.load %arg5[%c0_10, %c0_11, %c0_12] : memref<1x1x32xf32, #tpu.memory_space<vmem>>, vector<1x1x32xf32>
    tpu.vector_store %arg5[%c0_10, %c0_11, %c0_12], %15 {strides = array<i32>} : memref<1x1x32xf32, #tpu.memory_space<vmem>>, vector<1x1x32xf32>,
    %c0_13 = arith.constant 0 : index
    %c0_14 = arith.constant 0 : index
    %17 = vector.load %arg6[%c0_13, %c0_14] : memref<1x1xf32, #tpu.memory_space<vmem>>, vector<1x1xf32>
    %cst_15 = arith.constant dense<0.000000e+00> : vector<1x1xf32>
    %18 = vector.multi_reduction <add>, %5, %cst_15 [2] : vector<1x1x8xf32> to vector<1x1xf32>
    %19 = arith.addf %17, %18 : vector<1x1xf32>
    %c0_16 = arith.constant 0 : index
    %c0_17 = arith.constant 0 : index
    %20 = vector.load %arg6[%c0_16, %c0_17] : memref<1x1xf32, #tpu.memory_space<vmem>>, vector<1x1xf32>
    tpu.vector_store %arg6[%c0_16, %c0_17], %19 {strides = array<i32>} : memref<1x1xf32, #tpu.memory_space<vmem>>, vector<1x1xf32>,
    %c0_i32_18 = arith.constant 0 : i32
    %21 = arith.cmpi eq, %arg2, %c0_i32_18 : i32
    %22 = arith.extui %21 : i1 to i32
    %c0_i32_19 = arith.constant 0 : i32
    %23 = arith.cmpi ne, %22, %c0_i32_19 : i32
    scf.if %23 {
      %c0_20 = arith.constant 0 : index
      %c0_21 = arith.constant 0 : index
      %24 = vector.load %arg6[%c0_20, %c0_21] : memref<1x1xf32, #tpu.memory_space<vmem>>, vector<1x1xf32>
      %cst_22 = arith.constant 9.99999971E-10 : f32
      %25 = vector.broadcast %cst_22 : f32 to vector<1x1xf32>
      %26 = arith.maximumf %24, %25 : vector<1x1xf32>
      %c0_23 = arith.constant 0 : index
      %c0_24 = arith.constant 0 : index
      %c0_25 = arith.constant 0 : index
      %27 = vector.load %arg5[%c0_23, %c0_24, %c0_25] : memref<1x1x32xf32, #tpu.memory_space<vmem>>, vector<1x1x32xf32>
      %28 = vector.shape_cast %26 : vector<1x1xf32> to vector<1x1x1xf32>
      %29 = vector.broadcast %28 : vector<1x1x1xf32> to vector<1x1x32xf32>
      %30 = arith.divf %27, %29 : vector<1x1x32xf32>
      %c0_26 = arith.constant 0 : index
      %c0_27 = arith.constant 0 : index
      %c0_28 = arith.constant 0 : index
      %31 = vector.load %arg5[%c0_26, %c0_27, %c0_28] : memref<1x1x32xf32, #tpu.memory_space<vmem>>, vector<1x1x32xf32>
      tpu.vector_store %arg5[%c0_26, %c0_27, %c0_28], %30 {strides = array<i32>} : memref<1x1x32xf32, #tpu.memory_space<vmem>>, vector<1x1x32xf32>,
    } else {
    }
    return
  }
  func.func @transform_0(%arg0: i32, %arg1: i32, %arg2: i32) -> (i32, i32, i32) {
    %c0_i32 = arith.constant 0 : i32
    return %arg0, %arg2, %arg1 : i32, i32, i32
  }
  func.func @transform_1(%arg0: i32, %arg1: i32, %arg2: i32) -> (i32, i32, i32) {
    %c0_i32 = arith.constant 0 : i32
    %c0_i32_0 = arith.constant 0 : i32
    return %arg0, %c0_i32, %arg2 : i32, i32, i32
  }
  func.func @transform_2(%arg0: i32, %arg1: i32, %arg2: i32) -> (i32, i32, i32) {
    %c0_i32 = arith.constant 0 : i32
    %c0_i32_0 = arith.constant 0 : i32
    return %arg0, %c0_i32, %arg1 : i32, i32, i32
  }
}

</mosaic_0001>

<llo_original>
// kernel: tpu_custom_call.1
$region0: #{tpu_custom_call.1}
  #allocation0 [shape = 'u32[]', space=smem, size = 0x4, offset = 0x4, fixed_abs, tag = 'smem constant byte address 0x4 - core index']
  #allocation1 [shape = 'u32[72,128]{1,0:T(1,128)}', space=vmem, size = 0x9000, scoped, tag = 'internal scratch']
  #allocation2 [shape = 'f32[1,1]{1,0:T(1,128)}', space=vmem, size = 0x200, scoped, tag = 'scratch operand']
  %s0 = inlined_call_operand.hbm [shape: f32[2,8,32], index: 0, kind: input, shape index: {}]
  %s1 = inlined_call_operand.hbm [shape: s32[2,1,8], index: 1, kind: input, shape index: {}]
  %s2 = inlined_call_operand.hbm [shape: f32[2,1,32], index: 2, kind: output, shape index: {}]
  %s3 = sld [smem:[#allocation0]]
  $region57: #{tpu_custom_call.1} parent=0
    _
  %s5 = ssub.s32 1, %s3
  %s6 = scalar_select 0, %s5, %s3
  $region1: #{tpu_custom_call.1} parent=0
    #allocation3 [shape = 'u8[8192]{0}', space=vmem, size = 0x2000, scoped, tag = 'input window, operand 0']
    #allocation4 [shape = 's32[2]{0}', space=sflag, size = 0x8, scoped, tag = 'scoped memory for tpu_custom_call.1']
    #allocation5 [shape = 's32[2]{0}', space=sflag, size = 0x8, scoped, tag = 'scoped memory for tpu_custom_call.1']
    #allocation6 [shape = 'u8[1024]{0}', space=vmem, size = 0x400, scoped, tag = 'input window, operand 1']
    #allocation7 [shape = 's32[2]{0}', space=sflag, size = 0x8, scoped, tag = 'scoped memory for tpu_custom_call.1']
    #allocation8 [shape = 'u8[1024]{0}', space=vmem, size = 0x400, scoped, tag = 'output window, operand 0']
    %7 = vsyncpa [#allocation4], 0
    %s8 = scalar_lea.sflag [#allocation4], 1
    %9 = vsyncpa %s8, 0
    %10 = vsyncpa [#allocation7], 0
    %s11 = scalar_lea.sflag [#allocation7], 1
    %12 = vsyncpa %s11, 0
    %13 = vsyncpa [#allocation5], 0
    %s14 = scalar_lea.sflag [#allocation5], 1
    %15 = vsyncpa %s14, 0
    loop: start=0, step=1, limit=4
    $region2: #{tpu_custom_call.1} parent=1 // loop_pre_header
      _
    $region3: #{tpu_custom_call.1} parent=1 // loop_header
      %s17 = sphi 0, %s21
      %p18 = scmp.ge.s32.totalorder %s17, 4
      %s24 = sphi 0, %s43
      %s25 = sphi 0, %s39
      %s26 = sphi 0, %s35
      %s27 = sphi 0, %s24
      %s28 = sphi 0, %s25
      %s29 = sphi 0, %s26
      %s30 = sphi 0, %s27
      %s31 = sphi 0, %s28
      %s32 = sphi 0, %s29
      %s50 = sphi 0, %s52
      %s53 = sphi 0, %s50
      %s54 = sphi 0, %s53
      %s70 = sphi 0, %s54
      %s78 = sphi 0, %s80
      %s81 = sphi 0, %s78
      %s82 = sphi 0, %s81
      %s98 = sphi 0, %s82
      %s106 = sphi 0, %s108
      %s109 = sphi 0, %s106
      %s110 = sphi 0, %s109
      %s126 = sphi 0, %s110
    $region4: #{tpu_custom_call.1} parent=1 // loop_header_branch
      %20 = sbr.rel (%p18) target = $region8
    $region5: #{tpu_custom_call.1} parent=1 // loop_body
      %s22 = ssub.s32 %s17, 1
      %s23 = ssub.s32 %s17, 2
      %s33 = sadd.s32 1, %s26
      %p34 = scmp.ge.s32.totalorder %s33, 1
      %s35 = scalar_select %p34, 0, %s33
      %s36 = sadd.s32 1, %s25
      %s37 = scalar_select %p34, %s36, %s25
      %p38 = scmp.ge.s32.totalorder %s37, 1
      %s39 = scalar_select %p38, 0, %s37
      %s40 = sadd.s32 1, %s24
      %s41 = scalar_select %p38, %s40, %s24
      %p42 = scmp.ge.s32.totalorder %s41, 2
      %s43 = scalar_select %p42, 0, %s41
      %s44 = ssub.s32 %s24, %s43
      %s45 = ssub.s32 %s26, %s35
      %s46 = sor.u32 %s44, %s45
      %s47 = ssub.s32 %s25, %s39
      %s48 = sor.u32 %s46, %s47
      %p49 = scmp.eq.s32.totalorder %s48, 0
      %s51 = sadd.s32 %s50, 1
      %s52 = scalar_select %p49, %s50, %s51
      %p55 = pneg %p49
      %p56 = scmp.eq.s32.totalorder %s17, 1
      %p57 = por %p55, %p56
      %p58 = scmp.ne.s32.totalorder %s50, %s53
      %p59 = scmp.eq.s32.totalorder %s17, 0
      %p60 = por %p58, %p59
      %p61 = scmp.ne.s32.totalorder %s50, %s53
      %p62 = scmp.eq.s32.totalorder %s22, 1
      %p63 = por %p61, %p62
      %p64 = scmp.ne.s32.totalorder %s53, %s54
      %p65 = scmp.eq.s32.totalorder %s22, 0
      %p66 = por %p64, %p65
      %p67 = scmp.ne.s32.totalorder %s53, %s54
      %p68 = scmp.eq.s32.totalorder %s23, 1
      %p69 = por %p67, %p68
      %p71 = scmp.ne.s32.totalorder %s54, %s70
      %p72 = scmp.eq.s32.totalorder %s23, 0
      %p73 = por %p71, %p72
      %s74 = ssub.s32 %s24, %s43
      %s75 = ssub.s32 %s26, %s35
      %s76 = sor.u32 %s74, %s75
      %p77 = scmp.eq.s32.totalorder %s76, 0
      %s79 = sadd.s32 %s78, 1
      %s80 = scalar_select %p77, %s78, %s79
      %p83 = pneg %p77
      %p84 = scmp.eq.s32.totalorder %s17, 1
      %p85 = por %p83, %p84
      %p86 = scmp.ne.s32.totalorder %s78, %s81
      %p87 = scmp.eq.s32.totalorder %s17, 0
      %p88 = por %p86, %p87
      %p89 = scmp.ne.s32.totalorder %s78, %s81
      %p90 = scmp.eq.s32.totalorder %s22, 1
      %p91 = por %p89, %p90
      %p92 = scmp.ne.s32.totalorder %s81, %s82
      %p93 = scmp.eq.s32.totalorder %s22, 0
      %p94 = por %p92, %p93
      %p95 = scmp.ne.s32.totalorder %s81, %s82
      %p96 = scmp.eq.s32.totalorder %s23, 1
      %p97 = por %p95, %p96
      %p99 = scmp.ne.s32.totalorder %s82, %s98
      %p100 = scmp.eq.s32.totalorder %s23, 0
      %p101 = por %p99, %p100
      %s102 = ssub.s32 %s24, %s43
      %s103 = ssub.s32 %s25, %s39
      %s104 = sor.u32 %s102, %s103
      %p105 = scmp.eq.s32.totalorder %s104, 0
      %s107 = sadd.s32 %s106, 1
      %s108 = scalar_select %p105, %s106, %s107
      %p111 = pneg %p105
      %p112 = scmp.eq.s32.totalorder %s17, 1
      %p113 = por %p111, %p112
      %p114 = scmp.ne.s32.totalorder %s106, %s109
      %p115 = scmp.eq.s32.totalorder %s17, 0
      %p116 = por %p114, %p115
      %p117 = scmp.ne.s32.totalorder %s106, %s109
      %p118 = scmp.eq.s32.totalorder %s22, 1
      %p119 = por %p117, %p118
      %p120 = scmp.ne.s32.totalorder %s109, %s110
      %p121 = scmp.eq.s32.totalorder %s22, 0
      %p122 = por %p120, %p121
      %p123 = scmp.ne.s32.totalorder %s109, %s110
      %p124 = scmp.eq.s32.totalorder %s23, 1
      %p125 = por %p123, %p124
      %p127 = scmp.ne.s32.totalorder %s110, %s126
      %p128 = scmp.eq.s32.totalorder %s23, 0
      %p129 = por %p127, %p128
      %p130 = scmp.le.s32.totalorder 1, %s17
      %p131 = scmp.lt.s32.totalorder %s17, 3
      %p132 = pnand %p130, %p131
      %p133 = pneg %p132
      // Predicated region
      $region9: #{tpu_custom_call.1} parent=5 // pred_check
        _
      $region10: #{tpu_custom_call.1} parent=5 // pred_check_branch
        %135 = sbr.rel (%p132) target = $region12
      $region11: #{tpu_custom_call.1} parent=5 // pred_region
        %s136 = ssub.s32 %s17, 1
      $region12: #{tpu_custom_call.1} parent=5 // pred_fallthru
        _
      %p137 = scmp.lt.s32.totalorder %s17, 2
      // Predicated region
      $region13: #{tpu_custom_call.1} parent=5 // pred_check
        %p138 = pneg %p137
      $region14: #{tpu_custom_call.1} parent=5 // pred_check_branch
        %140 = sbr.rel (%p138) target = $region16
      $region15: #{tpu_custom_call.1} parent=5 // pred_region
        // Predicated region
        $region17: #{tpu_custom_call.1} parent=15 // pred_check
          %p141 = pneg %p60
        $region18: #{tpu_custom_call.1} parent=15 // pred_check_branch
          %143 = sbr.rel (%p141) target = $region20
        $region19: #{tpu_custom_call.1} parent=15 // pred_region
          %s144 = sand.u32 %s50, 1
          %s145 = scalar_lea.sflag [#allocation4], %s144
          %s146 = sand.u32 %s50, 1
          %s147 = smul.addr %s146, 8
          %s148 = scalar_lea.vmem [#allocation3], %s147
          %150 = vsyncadd %s145, 0
          %s151 = sadd.s32 %s25, %s26
          %s152 = sadd.s32 %s151, %s24
          %s153 = smul.addr %s152, 8
          %s154 = scalar_lea.hbm %s0, %s153
          %s156 = sshll.u32 %s154, 4
          %s157 = int_to_ptr.hbm [resolvable:$true] %s156
          %s158 = sshll.u32 %s148, 4
          %s159 = int_to_ptr.vmem [resolvable:$true] %s158
          %161 = dma.hbm_to_vmem [thread:$0]  %s157, 128, %s159, %s145
        $region20: #{tpu_custom_call.1} parent=15 // pred_fallthru
          _
        // Predicated region
        $region21: #{tpu_custom_call.1} parent=15 // pred_check
          %p162 = pneg %p88
        $region22: #{tpu_custom_call.1} parent=15 // pred_check_branch
          %164 = sbr.rel (%p162) target = $region24
        $region23: #{tpu_custom_call.1} parent=15 // pred_region
          %s165 = sand.u32 %s78, 1
          %s166 = scalar_lea.sflag [#allocation7], %s165
          %s167 = sand.u32 %s78, 1
          %s168 = scalar_lea.vmem [#allocation6], %s167
          %170 = vsyncadd %s166, 0
          %s171 = sadd.s32 %s26, %s24
          %s172 = scalar_lea.hbm %s1, %s171
          %s174 = sshll.u32 %s172, 4
          %s175 = int_to_ptr.hbm [resolvable:$true] %s174
          %s176 = sshll.u32 %s168, 4
          %s177 = int_to_ptr.vmem [resolvable:$true] %s176
          %179 = dma.hbm_to_vmem [thread:$0]  %s175, 16, %s177, %s166
        $region24: #{tpu_custom_call.1} parent=15 // pred_fallthru
          _
      $region16: #{tpu_custom_call.1} parent=5 // pred_fallthru
        _
      %p180 = scmp.le.s32.totalorder 1, %s17
      %p181 = scmp.lt.s32.totalorder %s17, 3
      %p182 = pnand %p180, %p181
      %p183 = pneg %p182
      // Predicated region
      $region25: #{tpu_custom_call.1} parent=5 // pred_check
        _
      $region26: #{tpu_custom_call.1} parent=5 // pred_check_branch
        %185 = sbr.rel (%p182) target = $region28
      $region27: #{tpu_custom_call.1} parent=5 // pred_region
        %s186 = ssub.s32 %s17, 1
        %s187 = sand.u32 %s53, 1
        %s188 = scalar_lea.sflag [#allocation4], %s187
        %s189 = sand.u32 %s53, 1
        %s190 = smul.addr %s189, 8
        %s191 = scalar_lea.vmem [#allocation3], %s190
        // Predicated region
        $region29: #{tpu_custom_call.1} parent=27 // pred_check
          %p192 = pneg %p66
        $region30: #{tpu_custom_call.1} parent=27 // pred_check_branch
          %194 = sbr.rel (%p192) target = $region32
        $region31: #{tpu_custom_call.1} parent=27 // pred_region
          %196 = dma.done %s188, 128
        $region32: #{tpu_custom_call.1} parent=27 // pred_fallthru
          _
        %s197 = sand.u32 %s81, 1
        %s198 = scalar_lea.sflag [#allocation7], %s197
        %s199 = sand.u32 %s81, 1
        %s200 = scalar_lea.vmem [#allocation6], %s199
        // Predicated region
        $region33: #{tpu_custom_call.1} parent=27 // pred_check
          %p201 = pneg %p94
        $region34: #{tpu_custom_call.1} parent=27 // pred_check_branch
          %203 = sbr.rel (%p201) target = $region36
        $region35: #{tpu_custom_call.1} parent=27 // pred_region
          %205 = dma.done %s198, 16
        $region36: #{tpu_custom_call.1} parent=27 // pred_fallthru
          _
        %s206 = sand.u32 %s53, 1
        %s207 = scalar_lea.sflag [#allocation4], %s206
        %s208 = sand.u32 %s53, 1
        %s209 = smul.addr %s208, 8
        %s210 = scalar_lea.vmem [#allocation3], %s209
        %p211 = pneg %p66
        %p212 = pneg %p63
        %s213 = sand.u32 %s81, 1
        %s214 = scalar_lea.sflag [#allocation7], %s213
        %s215 = sand.u32 %s81, 1
        %s216 = scalar_lea.vmem [#allocation6], %s215
        %p217 = pneg %p94
        %p218 = pneg %p91
        %p219 = pneg %p122
        %p220 = pneg %p119
        %s221 = sand.u32 %s109, 1
        %s222 = scalar_lea.sflag [#allocation5], %s221
        %s223 = sand.u32 %s109, 1
        %s224 = scalar_lea.vmem [#allocation8], %s223
        %p226 = scmp.eq.s32.totalorder %s29, 0
        // Predicated region
        $region37: #{tpu_custom_call.1} parent=27 // pred_check
          %p227 = pneg %p226
        $region38: #{tpu_custom_call.1} parent=27 // pred_check_branch
          %229 = sbr.rel (%p227) target = $region40
        $region39: #{tpu_custom_call.1} parent=27 // pred_region
          %vm230 = vcmask 253952
          %231 = vst.msk [vmem:[%s224] sm:$0x1] %vm230, 0.0
          %vm232 = vcmask 0
          %233 = vst.msk [vmem:[#allocation2] sm:$0x1] %vm232, 0.0
        $region40: #{tpu_custom_call.1} parent=27 // pred_fallthru
          _
        %v234 = vld [vmem:[%s191] sm:$0xff]
        %v235 = vld [vmem:[%s200] sm:$0x1]
        %v236 = vcvt.s32.f32 %v235
        %v237 = vpack.c.bf16 %v236, %v236
        %v238 = vpack.c.bf16 %v234, %v234
        %v239 = vunpack.c.l.bf16 %v238
        %v240 = vsub.f32 %v234, %v239
        %v241 = vpack.c.bf16 %v240, %v240
        %vm242 = vcmask 64512
        %v244 = vsel %vm242, %v237, 0
        %vm246 = vcmask 1043456
        %v248 = vsel %vm246, %v241, 0
        %250 = vmatpush.bf16.msra.mxu0 0
        %251 = vmatpush.bf16.msra.mxu0 0
        %252 = vmatpush.bf16.msra.mxu0 0
        %253 = vmatpush.bf16.msra.mxu0 0
        %254 = vmatpush.bf16.msra.mxu0 0
        %255 = vmatpush.bf16.msra.mxu0 0
        %256 = vmatpush.bf16.msra.mxu0 0
        %257 = vmatpush.bf16.msra.mxu0 %v248
        %258 = vmatmul.bf16.gmra.mxu0 %v244
        %v259 = vpop.f32.mrf.mxu0
        %v260 = vadd.f32 0.0, %v259
        %v261 = vpop.f32.mrf.mxu0
        %262 = vdwg.mxu0
        %v264 = vsel %vm246, %v238, 0
        %266 = vmatpush.bf16.msra.mxu0 0
        %267 = vmatpush.bf16.msra.mxu0 0
        %268 = vmatpush.bf16.msra.mxu0 0
        %269 = vmatpush.bf16.msra.mxu0 0
        %270 = vmatpush.bf16.msra.mxu0 0
        %271 = vmatpush.bf16.msra.mxu0 0
        %272 = vmatpush.bf16.msra.mxu0 0
        %273 = vmatpush.bf16.msra.mxu0 %v264
        %274 = vmatmul.bf16.gmra.mxu0 %v244
        %v275 = vpop.f32.mrf.mxu0
        %v276 = vadd.f32 %v260, %v275
        %v277 = vpop.f32.mrf.mxu0
        %278 = vdwg.mxu0
        %v279 = vld [vmem:[%s224] sm:$0x1]
        %v280 = vadd.f32 %v279, %v276
        %vm281 = vcmask 253952
        %282 = vst.msk [vmem:[%s224] sm:$0x1] %vm281, %v280
        %v283 = vld [vmem:[#allocation2] sm:$0x1]
        %vm284 = vcmask 57344
        %v285 = vsel %vm284, %v236, 0.0
        %286 = vadd.xlane.f32.xlu0 %v285
        %v287 = vpop.xlane.xlu0 %286
        %v288 = vadd.f32 %v283, %v287
        %vm289 = vcmask 0
        %290 = vst.msk [vmem:[#allocation2] sm:$0x1] %vm289, %v288
        // Predicated region
        $region41: #{tpu_custom_call.1} parent=27 // pred_check
          %p291 = pneg %p226
        $region42: #{tpu_custom_call.1} parent=27 // pred_check_branch
          %293 = sbr.rel (%p291) target = $region44
        $region43: #{tpu_custom_call.1} parent=27 // pred_region
          %v294 = vld [vmem:[#allocation2] sm:$0x1]
          %v295 = vmax.f32 %v294, 1e-09
          %v296 = vld [vmem:[%s224] sm:$0x1]
          %298 = vset.pattern.permute.xlu0 0
          %299 = vperm.xlu0 %298, %v295
          %v300 = vpop.permute.xlu0 %299
          %v302 = vperm.slane %v300, 0
          %v303 = vrcp.pop %v302
          %v304 = vmul.f32 %v302, %v303
          %v305 = vsub.f32 1.0, %v304
          %v306 = vmul.f32 %v303, %v305
          %v307 = vadd.f32 %v303, %v306
          %vm308 = vweird.f32 %v302
          %vm309 = vweird.f32 %v303
          %vm310 = vmor %vm308, %vm309
          %v311 = vsel %vm310, %v303, %v307
          %v312 = vand.u32 2147483647, %v302
          %vm313 = vcmp.eq.f32.partialorder %v312, 8.507059e+37
          %v314 = vand.u32 %v302, 2147483648
          %v315 = vor.u32 1.1754944e-38, %v314
          %v316 = vsel %vm313, %v315, %v311
          %v317 = vmul.f32 %v296, %v316
          %318 = vst.msk [vmem:[%s224] sm:$0x1] %vm281, %v317
        $region44: #{tpu_custom_call.1} parent=27 // pred_fallthru
          _
        %s319 = sand.u32 %s109, 1
        %s320 = scalar_lea.sflag [#allocation5], %s319
        %s321 = sand.u32 %s109, 1
        %s322 = scalar_lea.vmem [#allocation8], %s321
        // Predicated region
        $region45: #{tpu_custom_call.1} parent=27 // pred_check
          %p323 = pneg %p119
        $region46: #{tpu_custom_call.1} parent=27 // pred_check_branch
          %325 = sbr.rel (%p323) target = $region48
        $region47: #{tpu_custom_call.1} parent=27 // pred_region
          %327 = vsyncadd %s320, 0
          %s328 = sadd.s32 %s28, %s27
          %s329 = scalar_lea.hbm %s2, %s328
          %s331 = sshll.u32 %s322, 4
          %s332 = int_to_ptr.vmem [resolvable:$true] %s331
          %s333 = sshll.u32 %s329, 4
          %s334 = int_to_ptr.hbm [resolvable:$true] %s333
          %336 = dma.vmem_to_hbm [thread:$0]  %s332, 16, %s334, %s320
        $region48: #{tpu_custom_call.1} parent=27 // pred_fallthru
          _
      $region28: #{tpu_custom_call.1} parent=5 // pred_fallthru
        _
      %p337 = scmp.le.s32.totalorder 2, %s17
      // Predicated region
      $region49: #{tpu_custom_call.1} parent=5 // pred_check
        %p338 = pneg %p337
      $region50: #{tpu_custom_call.1} parent=5 // pred_check_branch
        %340 = sbr.rel (%p338) target = $region52
      $region51: #{tpu_custom_call.1} parent=5 // pred_region
        %s341 = ssub.s32 %s17, 2
        // Predicated region
        $region53: #{tpu_custom_call.1} parent=51 // pred_check
          %p342 = pneg %p125
        $region54: #{tpu_custom_call.1} parent=51 // pred_check_branch
          %344 = sbr.rel (%p342) target = $region56
        $region55: #{tpu_custom_call.1} parent=51 // pred_region
          %s345 = sand.u32 %s110, 1
          %s346 = scalar_lea.sflag [#allocation5], %s345
          %s347 = sand.u32 %s110, 1
          %s348 = scalar_lea.vmem [#allocation8], %s347
          %350 = dma.done %s346, 16
        $region56: #{tpu_custom_call.1} parent=51 // pred_fallthru
          _
      $region52: #{tpu_custom_call.1} parent=5 // pred_fallthru
        _
    $region6: #{tpu_custom_call.1} parent=1 // loop_footer
      %s21 = sadd.s32 1, %s17
    $region7: #{tpu_custom_call.1} parent=1 // loop_footer_branch
      %16 = sbr.rel target = $region3
    $region8: #{tpu_custom_call.1} parent=1 // loop_exit
      _
    %351 = vsyncpa [#allocation4], 1
    %s352 = scalar_lea.sflag [#allocation4], 1
    %353 = vsyncpa %s352, 1
    %354 = vsyncpa [#allocation7], 1
    %s355 = scalar_lea.sflag [#allocation7], 1
    %356 = vsyncpa %s355, 1
    %357 = vsyncpa [#allocation5], 1
    %s358 = scalar_lea.sflag [#allocation5], 1
    %359 = vsyncpa %s358, 1

</llo_original>
